<compile_context>
chip_gen: v7x
topology: tpu7x:2x2x1
jax: 0.10.0
libtpu: 0.0.40
codegen_flags: <defaults>
</compile_context>

<pallas_src>
import jax
import jax.numpy as jnp
from jax.experimental import pallas as pl
from jax.experimental.pallas import tpu as pltpu


def _round_up(x, m):
    return (x + m - 1) // m * m


def decoder_kernel(z_ref,
                   w1_ref, b1_ref,
                   w2_ref, b2_ref,
                   w3_ref, b3_ref,
                   w4_ref, b4_ref,
                   out_ref):
    """Fused 4-layer MLP: (Linear+ReLU) x3, Linear+Sigmoid.

    All weights are VMEM-resident full blocks, so a batch tile runs the whole
    forward without touching HBM between layers.  Matmuls take bf16 operands
    (MXU fast path) and accumulate in f32; elementwise epilogues run in f32.
    """
    x = z_ref[...]                                            # bf16 (tile, H)

    # Layer 1: Linear(hid, d3) + ReLU
    h = jnp.dot(x, w1_ref[...], preferred_element_type=jnp.float32) + b1_ref[...]
    h = jnp.maximum(h, 0.0).astype(jnp.bfloat16)

    # Layer 2: Linear(d3, d2) + ReLU
    h = jnp.dot(h, w2_ref[...], preferred_element_type=jnp.float32) + b2_ref[...]
    h = jnp.maximum(h, 0.0).astype(jnp.bfloat16)

    # Layer 3: Linear(d2, d1) + ReLU
    h = jnp.dot(h, w3_ref[...], preferred_element_type=jnp.float32) + b3_ref[...]
    h = jnp.maximum(h, 0.0).astype(jnp.bfloat16)

    # Layer 4: Linear(d1, input_dim) + Sigmoid (f32 epilogue, EUP exp)
    h = jnp.dot(h, w4_ref[...], preferred_element_type=jnp.float32) + b4_ref[...]
    out_ref[...] = jax.nn.sigmoid(h).astype(out_ref.dtype)


def decoder_forward(z, params, *, batch_tile=None):
    """Run the fused decoder kernel, tiling over the (padded) batch dim."""
    (w1, b1), (w2, b2), (w3, b3), (w4, b4) = params
    B, H = z.shape
    D3 = w1.shape[1]
    D2 = w2.shape[1]
    D1 = w3.shape[1]
    IN = w4.shape[1]

    # Tile selection: up to 256 rows to fill the MXU, but aim for >= 2 grid
    # steps so v7x's two TensorCores both get work.  Multiple of 16 keeps
    # bf16 sublane tiling happy.
    if batch_tile is None:
        batch_tile = min(256, max(16, _round_up(-(-B // 2), 16)))
    batch_tile = max(16, _round_up(batch_tile, 16))

    # Pad batch to a tile multiple (tail handled by padding, sliced off below).
    B_pad = _round_up(B, batch_tile)
    z_bf16 = z.astype(jnp.bfloat16)
    if B_pad != B:
        z_bf16 = jnp.pad(z_bf16, ((0, B_pad - B), (0, 0)))

    # bf16 weights into the MXU; biases stay f32 for the f32 epilogue.
    w1b, w2b, w3b, w4b = (w.astype(jnp.bfloat16) for w in (w1, w2, w3, w4))

    # Weight/bias blocks are full arrays with a constant index_map, so the
    # pipeline fetches them once and keeps them VMEM-resident across steps.
    full = lambda shape: pl.BlockSpec(shape, lambda i: (0, 0))

    grid_spec = pltpu.PrefetchScalarGridSpec(
        num_scalar_prefetch=0,
        grid=(B_pad // batch_tile,),
        in_specs=[
            pl.BlockSpec((batch_tile, H), lambda i: (i, 0)),   # z tile
            full((H, D3)), full((1, D3)),                      # W1, b1
            full((D3, D2)), full((1, D2)),                     # W2, b2
            full((D2, D1)), full((1, D1)),                     # W3, b3
            full((D1, IN)), full((1, IN)),                     # W4, b4
        ],
        out_specs=pl.BlockSpec((batch_tile, IN), lambda i: (i, 0)),
    )

    # Advisory cost estimate for XLA's scheduler around the custom call.
    mac_terms = H * D3 + D3 * D2 + D2 * D1 + D1 * IN
    weight_bytes = 2 * mac_terms + 4 * (D3 + D2 + D1 + IN)
    cost = pl.CostEstimate(
        flops=2 * B_pad * mac_terms,
        transcendentals=B_pad * IN,                     # sigmoid
        bytes_accessed=B_pad * (2 * H + 4 * IN) + weight_bytes,
    )

    out = pl.pallas_call(
        decoder_kernel,
        out_shape=jax.ShapeDtypeStruct((B_pad, IN), jnp.float32),
        grid_spec=grid_spec,
        compiler_params=pltpu.CompilerParams(
            dimension_semantics=("parallel",),
            vmem_limit_bytes=48 << 20),
        cost_estimate=cost,
    )(z_bf16, w1b, b1, w2b, b2, w3b, b3, w4b, b4)

    return out[:B]


def init_linear(key, fan_in, fan_out):
    """Deterministic init mimicking nn.Linear's default U(-1/sqrt(in), 1/sqrt(in))."""
    kw, kb = jax.random.split(key)
    bound = 1.0 / jnp.sqrt(float(fan_in))
    # stored as (in_features, out_features) so forward is x @ W + b
    w = jax.random.uniform(kw, (fan_in, fan_out), jnp.float32, -bound, bound)
    b = jax.random.uniform(kb, (1, fan_out), jnp.float32, -bound, bound)
    return w, b


def decoder_reference(z, params, matmul_dtype=jnp.float32):
    """Pure-JAX reference of the same forward pass."""
    (w1, b1), (w2, b2), (w3, b3), (w4, b4) = params

    def lin(x, w, b):
        return jnp.dot(x.astype(matmul_dtype), w.astype(matmul_dtype),
                       preferred_element_type=jnp.float32) + b

    h = jnp.maximum(lin(z, w1, b1), 0.0)
    h = jnp.maximum(lin(h, w2, b2), 0.0)
    h = jnp.maximum(lin(h, w3, b3), 0.0)
    return jax.nn.sigmoid(lin(h, w4, b4))


if __name__ == "__main__":
    # Small, TPU-tile-friendly sizes consistent with the module structure
    # (Decoder(input_dim, inter_dims=[d1, d2, d3], hid_dim)).
    HID_DIM = 16
    INTER_DIMS = [128, 128, 256]   # [d1, d2, d3]
    INPUT_DIM = 256
    BATCH = 50                     # deliberately not tile-aligned (exercises padding)

    key = jax.random.PRNGKey(0)
    k_z, k1, k2, k3, k4 = jax.random.split(key, 5)

    d1, d2, d3 = INTER_DIMS
    params = (
        init_linear(k1, HID_DIM, d3),    # hid  -> 256
        init_linear(k2, d3, d2),         # 256  -> 128
        init_linear(k3, d2, d1),         # 128  -> 128
        init_linear(k4, d1, INPUT_DIM),  # 128  -> 256
    )

    z = jax.random.normal(k_z, (BATCH, HID_DIM), jnp.float32)

    out = decoder_forward(z, params)
    out = jax.block_until_ready(out)

    assert out.shape == (BATCH, INPUT_DIM)

    # Loose check vs. full-f32 reference (kernel uses bf16 matmuls).
    ref_f32 = decoder_reference(z, params, matmul_dtype=jnp.float32)
    assert jnp.allclose(out, ref_f32, atol=2e-2, rtol=2e-2), \
        "mismatch vs f32 JAX reference"

    # Tighter check vs. a bf16-matmul reference (same arithmetic as kernel).
    ref_bf16 = decoder_reference(z, params, matmul_dtype=jnp.bfloat16)
    assert jnp.allclose(out, ref_bf16, atol=5e-3, rtol=5e-3), \
        "mismatch vs bf16 JAX reference"

    print("KERNEL_OK")
</pallas_src>

<mosaic_0001>
module attributes {stable_mosaic.version = 11 : i64} {
  func.func @decoder_kernel(%arg0: i32, %arg1: memref<32x16xbf16, #tpu.memory_space<vmem>>, %arg2: memref<16x256xbf16, #tpu.memory_space<vmem>>, %arg3: memref<1x256xf32, #tpu.memory_space<vmem>>, %arg4: memref<256x128xbf16, #tpu.memory_space<vmem>>, %arg5: memref<1x128xf32, #tpu.memory_space<vmem>>, %arg6: memref<128x128xbf16, #tpu.memory_space<vmem>>, %arg7: memref<1x128xf32, #tpu.memory_space<vmem>>, %arg8: memref<128x256xbf16, #tpu.memory_space<vmem>>, %arg9: memref<1x256xf32, #tpu.memory_space<vmem>>, %arg10: memref<32x256xf32, #tpu.memory_space<vmem>>) attributes {dimension_semantics = [#tpu.dimension_semantics<parallel>], iteration_bounds = array<i64: 2>, scalar_prefetch = 0 : i64, scratch_operands = 0 : i64, tpu.core_type = #tpu.core_type<tc>, window_params = [{transform_indices = @transform_0, window_bounds = array<i64: 32, 16>}, {pipeline_mode = #tpu.pipeline_mode<synchronous>, transform_indices = @transform_1, window_bounds = array<i64: 16, 256>}, {pipeline_mode = #tpu.pipeline_mode<synchronous>, transform_indices = @transform_2, window_bounds = array<i64: 1, 256>}, {pipeline_mode = #tpu.pipeline_mode<synchronous>, transform_indices = @transform_3, window_bounds = array<i64: 256, 128>}, {pipeline_mode = #tpu.pipeline_mode<synchronous>, transform_indices = @transform_4, window_bounds = array<i64: 1, 128>}, {pipeline_mode = #tpu.pipeline_mode<synchronous>, transform_indices = @transform_5, window_bounds = array<i64: 128, 128>}, {pipeline_mode = #tpu.pipeline_mode<synchronous>, transform_indices = @transform_6, window_bounds = array<i64: 1, 128>}, {pipeline_mode = #tpu.pipeline_mode<synchronous>, transform_indices = @transform_7, window_bounds = array<i64: 128, 256>}, {pipeline_mode = #tpu.pipeline_mode<synchronous>, transform_indices = @transform_8, window_bounds = array<i64: 1, 256>}, {transform_indices = @transform_9, window_bounds = array<i64: 32, 256>}]} {
    %c0 = arith.constant 0 : index
    %c0_0 = arith.constant 0 : index
    %0 = vector.load %arg1[%c0, %c0_0] : memref<32x16xbf16, #tpu.memory_space<vmem>>, vector<32x16xbf16>
    %c0_1 = arith.constant 0 : index
    %c0_2 = arith.constant 0 : index
    %1 = vector.load %arg2[%c0_1, %c0_2] : memref<16x256xbf16, #tpu.memory_space<vmem>>, vector<16x256xbf16>
    %cst = arith.constant dense<0.000000e+00> : vector<32x256xf32>
    %2 = tpu.matmul %0, %1, %cst {dimension_numbers = #tpu.dot_dimension_numbers<[1], [0], [0], [1], [0, 0, 1, 1], [], []>} : vector<32x16xbf16>, vector<16x256xbf16>, vector<32x256xf32> -> vector<32x256xf32>
    %c0_3 = arith.constant 0 : index
    %c0_4 = arith.constant 0 : index
    %3 = vector.load %arg3[%c0_3, %c0_4] : memref<1x256xf32, #tpu.memory_space<vmem>>, vector<1x256xf32>
    %4 = vector.broadcast %3 : vector<1x256xf32> to vector<32x256xf32>
    %5 = arith.addf %2, %4 : vector<32x256xf32>
    %cst_5 = arith.constant 0.000000e+00 : f32
    %6 = vector.broadcast %cst_5 : f32 to vector<32x256xf32>
    %7 = arith.maximumf %5, %6 : vector<32x256xf32>
    %8 = arith.truncf %7 : vector<32x256xf32> to vector<32x256xbf16>
    %c0_6 = arith.constant 0 : index
    %c0_7 = arith.constant 0 : index
    %9 = vector.load %arg4[%c0_6, %c0_7] : memref<256x128xbf16, #tpu.memory_space<vmem>>, vector<256x128xbf16>
    %cst_8 = arith.constant dense<0.000000e+00> : vector<32x128xf32>
    %10 = tpu.matmul %8, %9, %cst_8 {dimension_numbers = #tpu.dot_dimension_numbers<[1], [0], [0], [1], [0, 0, 1, 1], [], []>} : vector<32x256xbf16>, vector<256x128xbf16>, vector<32x128xf32> -> vector<32x128xf32>
    %c0_9 = arith.constant 0 : index
    %c0_10 = arith.constant 0 : index
    %11 = vector.load %arg5[%c0_9, %c0_10] : memref<1x128xf32, #tpu.memory_space<vmem>>, vector<1x128xf32>
    %12 = vector.broadcast %11 : vector<1x128xf32> to vector<32x128xf32>
    %13 = arith.addf %10, %12 : vector<32x128xf32>
    %cst_11 = arith.constant 0.000000e+00 : f32
    %14 = vector.broadcast %cst_11 : f32 to vector<32x128xf32>
    %15 = arith.maximumf %13, %14 : vector<32x128xf32>
    %16 = arith.truncf %15 : vector<32x128xf32> to vector<32x128xbf16>
    %c0_12 = arith.constant 0 : index
    %c0_13 = arith.constant 0 : index
    %17 = vector.load %arg6[%c0_12, %c0_13] : memref<128x128xbf16, #tpu.memory_space<vmem>>, vector<128x128xbf16>
    %cst_14 = arith.constant dense<0.000000e+00> : vector<32x128xf32>
    %18 = tpu.matmul %16, %17, %cst_14 {dimension_numbers = #tpu.dot_dimension_numbers<[1], [0], [0], [1], [0, 0, 1, 1], [], []>} : vector<32x128xbf16>, vector<128x128xbf16>, vector<32x128xf32> -> vector<32x128xf32>
    %c0_15 = arith.constant 0 : index
    %c0_16 = arith.constant 0 : index
    %19 = vector.load %arg7[%c0_15, %c0_16] : memref<1x128xf32, #tpu.memory_space<vmem>>, vector<1x128xf32>
    %20 = vector.broadcast %19 : vector<1x128xf32> to vector<32x128xf32>
    %21 = arith.addf %18, %20 : vector<32x128xf32>
    %cst_17 = arith.constant 0.000000e+00 : f32
    %22 = vector.broadcast %cst_17 : f32 to vector<32x128xf32>
    %23 = arith.maximumf %21, %22 : vector<32x128xf32>
    %24 = arith.truncf %23 : vector<32x128xf32> to vector<32x128xbf16>
    %c0_18 = arith.constant 0 : index
    %c0_19 = arith.constant 0 : index
    %25 = vector.load %arg8[%c0_18, %c0_19] : memref<128x256xbf16, #tpu.memory_space<vmem>>, vector<128x256xbf16>
    %cst_20 = arith.constant dense<0.000000e+00> : vector<32x256xf32>
    %26 = tpu.matmul %24, %25, %cst_20 {dimension_numbers = #tpu.dot_dimension_numbers<[1], [0], [0], [1], [0, 0, 1, 1], [], []>} : vector<32x128xbf16>, vector<128x256xbf16>, vector<32x256xf32> -> vector<32x256xf32>
    %c0_21 = arith.constant 0 : index
    %c0_22 = arith.constant 0 : index
    %27 = vector.load %arg9[%c0_21, %c0_22] : memref<1x256xf32, #tpu.memory_space<vmem>>, vector<1x256xf32>
    %28 = vector.broadcast %27 : vector<1x256xf32> to vector<32x256xf32>
    %29 = arith.addf %26, %28 : vector<32x256xf32>
    %30 = arith.negf %29 : vector<32x256xf32>
    %31 = math.exp %30 : vector<32x256xf32>
    %cst_23 = arith.constant 1.000000e+00 : f32
    %32 = vector.broadcast %cst_23 : f32 to vector<32x256xf32>
    %33 = arith.addf %32, %31 : vector<32x256xf32>
    %34 = arith.divf %32, %33 : vector<32x256xf32>
    %c0_24 = arith.constant 0 : index
    %c0_25 = arith.constant 0 : index
    %35 = vector.load %arg10[%c0_24, %c0_25] : memref<32x256xf32, #tpu.memory_space<vmem>>, vector<32x256xf32>
    tpu.vector_store %arg10[%c0_24, %c0_25], %34 {strides = array<i32>} : memref<32x256xf32, #tpu.memory_space<vmem>>, vector<32x256xf32>,
    return
  }
  func.func @transform_0(%arg0: i32) -> (i32, i32) {
    %c0_i32 = arith.constant 0 : i32
    %c0_i32_0 = arith.constant 0 : i32
    return %arg0, %c0_i32 : i32, i32
  }
  func.func @transform_1(%arg0: i32) -> (i32, i32) {
    %c0_i32 = arith.constant 0 : i32
    %c0_i32_0 = arith.constant 0 : i32
    %c0_i32_1 = arith.constant 0 : i32
    return %c0_i32, %c0_i32_0 : i32, i32
  }
  func.func @transform_2(%arg0: i32) -> (i32, i32) {
    %c0_i32 = arith.constant 0 : i32
    %c0_i32_0 = arith.constant 0 : i32
    %c0_i32_1 = arith.constant 0 : i32
    return %c0_i32, %c0_i32_0 : i32, i32
  }
  func.func @transform_3(%arg0: i32) -> (i32, i32) {
    %c0_i32 = arith.constant 0 : i32
    %c0_i32_0 = arith.constant 0 : i32
    %c0_i32_1 = arith.constant 0 : i32
    return %c0_i32, %c0_i32_0 : i32, i32
  }
  func.func @transform_4(%arg0: i32) -> (i32, i32) {
    %c0_i32 = arith.constant 0 : i32
    %c0_i32_0 = arith.constant 0 : i32
    %c0_i32_1 = arith.constant 0 : i32
    return %c0_i32, %c0_i32_0 : i32, i32
  }
  func.func @transform_5(%arg0: i32) -> (i32, i32) {
    %c0_i32 = arith.constant 0 : i32
    %c0_i32_0 = arith.constant 0 : i32
    %c0_i32_1 = arith.constant 0 : i32
    return %c0_i32, %c0_i32_0 : i32, i32
  }
  func.func @transform_6(%arg0: i32) -> (i32, i32) {
    %c0_i32 = arith.constant 0 : i32
    %c0_i32_0 = arith.constant 0 : i32
    %c0_i32_1 = arith.constant 0 : i32
    return %c0_i32, %c0_i32_0 : i32, i32
  }
  func.func @transform_7(%arg0: i32) -> (i32, i32) {
    %c0_i32 = arith.constant 0 : i32
    %c0_i32_0 = arith.constant 0 : i32
    %c0_i32_1 = arith.constant 0 : i32
    return %c0_i32, %c0_i32_0 : i32, i32
  }
  func.func @transform_8(%arg0: i32) -> (i32, i32) {
    %c0_i32 = arith.constant 0 : i32
    %c0_i32_0 = arith.constant 0 : i32
    %c0_i32_1 = arith.constant 0 : i32
    return %c0_i32, %c0_i32_0 : i32, i32
  }
  func.func @transform_9(%arg0: i32) -> (i32, i32) {
    %c0_i32 = arith.constant 0 : i32
    %c0_i32_0 = arith.constant 0 : i32
    return %arg0, %c0_i32 : i32, i32
  }
}

</mosaic_0001>

<llo_original>
// kernel: tpu_custom_call.1
$region0: #{tpu_custom_call.1}
  #allocation0 [shape = 'u32[]', space=smem, size = 0x4, offset = 0x4, fixed_abs, tag = 'smem constant byte address 0x4 - core index']
  #allocation1 [shape = 'u32[144,128]{1,0:T(1,128)}', space=vmem, size = 0x12000, scoped, tag = 'internal scratch']
  %s0 = inlined_call_operand.vmem [shape: bf16[64,16], index: 0, kind: input, shape index: {}]
  %s1 = inlined_call_operand.vmem [shape: bf16[16,256], index: 1, kind: input, shape index: {}]
  %s2 = inlined_call_operand.vmem [shape: f32[1,256], index: 2, kind: input, shape index: {}]
  %s3 = inlined_call_operand.hbm [shape: bf16[256,128], index: 3, kind: input, shape index: {}]
  %s4 = inlined_call_operand.vmem [shape: f32[1,128], index: 4, kind: input, shape index: {}]
  %s5 = inlined_call_operand.hbm [shape: bf16[128,128], index: 5, kind: input, shape index: {}]
  %s6 = inlined_call_operand.vmem [shape: f32[1,128], index: 6, kind: input, shape index: {}]
  %s7 = inlined_call_operand.hbm [shape: bf16[128,256], index: 7, kind: input, shape index: {}]
  %s8 = inlined_call_operand.vmem [shape: f32[1,256], index: 8, kind: input, shape index: {}]
  %s9 = inlined_call_operand.hbm [shape: f32[64,256], index: 9, kind: output, shape index: {}]
  %s10 = sld [smem:[#allocation0]]
  $region81: #{tpu_custom_call.1} parent=0
    _
  %s12 = ssub.s32 1, %s10
  %s13 = scalar_select 0, %s12, %s10
  $region1: #{tpu_custom_call.1} parent=0
    #allocation2 [shape = 'u8[65536]{0}', space=vmem, size = 0x10000, scoped, tag = 'input window, operand 3, single buffered']
    #allocation3 [shape = 's32[2]{0}', space=sflag, size = 0x8, scoped, tag = 'scoped memory for tpu_custom_call.1']
    #allocation4 [shape = 's32[2]{0}', space=sflag, size = 0x8, scoped, tag = 'scoped memory for tpu_custom_call.1']
    #allocation5 [shape = 'u8[32768]{0}', space=vmem, size = 0x8000, scoped, tag = 'input window, operand 5, single buffered']
    #allocation6 [shape = 's32[1]{0}', space=sflag, size = 0x4, scoped, tag = 'scoped memory for tpu_custom_call.1']
    #allocation7 [shape = 'u8[65536]{0}', space=vmem, size = 0x10000, scoped, tag = 'input window, operand 7, single buffered']
    #allocation8 [shape = 'u8[65536]{0}', space=vmem, size = 0x10000, scoped, tag = 'output window, operand 0']
    %14 = vsyncpa [#allocation3], 0
    %15 = vsyncpa [#allocation6], 0
    %16 = vsyncpa [#allocation4], 0
    %s17 = scalar_lea.sflag [#allocation4], 1
    %18 = vsyncpa %s17, 0
    loop: start=0, step=1, limit=4
    $region2: #{tpu_custom_call.1} parent=1 // loop_pre_header
      _
    $region3: #{tpu_custom_call.1} parent=1 // loop_header
      %s20 = sphi 0, %s24
      %p21 = scmp.ge.s32.totalorder %s20, 4
      %s30 = sphi 0, %s32
      %s33 = sphi 0, %s30
      %s34 = sphi 0, %s33
      %s50 = sphi 0, %s34
      %s54 = sphi 0, %s54
      %s56 = sphi 0, %s54
      %s57 = sphi 0, %s56
      %s71 = sphi 0, %s57
      %s75 = sphi 0, %s75
      %s77 = sphi 0, %s75
      %s78 = sphi 0, %s77
      %s92 = sphi 0, %s78
      %s96 = sphi 0, %s96
      %s98 = sphi 0, %s96
      %s99 = sphi 0, %s98
      %s113 = sphi 0, %s99
      %s117 = sphi 0, %s117
      %s119 = sphi 0, %s117
      %s120 = sphi 0, %s119
      %s134 = sphi 0, %s120
      %s138 = sphi 0, %s138
      %s140 = sphi 0, %s138
      %s141 = sphi 0, %s140
      %s155 = sphi 0, %s141
      %s159 = sphi 0, %s159
      %s161 = sphi 0, %s159
      %s162 = sphi 0, %s161
      %s176 = sphi 0, %s162
      %s180 = sphi 0, %s180
      %s182 = sphi 0, %s180
      %s183 = sphi 0, %s182
      %s197 = sphi 0, %s183
      %s201 = sphi 0, %s201
      %s203 = sphi 0, %s201
      %s204 = sphi 0, %s203
      %s218 = sphi 0, %s204
      %s224 = sphi 0, %s226
      %s227 = sphi 0, %s224
      %s228 = sphi 0, %s227
      %s244 = sphi 0, %s228
    $region4: #{tpu_custom_call.1} parent=1 // loop_header_branch
      %23 = sbr.rel (%p21) target = $region8
    $region5: #{tpu_custom_call.1} parent=1 // loop_body
      %s25 = ssub.s32 %s20, 1
      %s26 = ssub.s32 %s20, 2
      %s27 = sadd.s32 %s20, 1
      %s28 = ssub.s32 %s20, %s27
      %p29 = scmp.eq.s32.totalorder %s28, 0
      %s31 = sadd.s32 %s30, 1
      %s32 = scalar_select %p29, %s30, %s31
      %p35 = pneg %p29
      %p36 = scmp.eq.s32.totalorder %s20, 1
      %p37 = por %p35, %p36
      %p38 = scmp.ne.s32.totalorder %s30, %s33
      %p39 = scmp.eq.s32.totalorder %s20, 0
      %p40 = por %p38, %p39
      %p41 = scmp.ne.s32.totalorder %s30, %s33
      %p42 = scmp.eq.s32.totalorder %s25, 1
      %p43 = por %p41, %p42
      %p44 = scmp.ne.s32.totalorder %s33, %s34
      %p45 = scmp.eq.s32.totalorder %s25, 0
      %p46 = por %p44, %p45
      %p47 = scmp.ne.s32.totalorder %s33, %s34
      %p48 = scmp.eq.s32.totalorder %s26, 1
      %p49 = por %p47, %p48
      %p51 = scmp.ne.s32.totalorder %s34, %s50
      %p52 = scmp.eq.s32.totalorder %s26, 0
      %p53 = por %p51, %p52
      %s55 = sadd.s32 %s54, 1
      %p58 = scmp.eq.s32.totalorder %s20, 1
      %p59 = scmp.ne.s32.totalorder %s54, %s56
      %p60 = scmp.eq.s32.totalorder %s20, 0
      %p61 = por %p59, %p60
      %p62 = scmp.ne.s32.totalorder %s54, %s56
      %p63 = scmp.eq.s32.totalorder %s25, 1
      %p64 = por %p62, %p63
      %p65 = scmp.ne.s32.totalorder %s56, %s57
      %p66 = scmp.eq.s32.totalorder %s25, 0
      %p67 = por %p65, %p66
      %p68 = scmp.ne.s32.totalorder %s56, %s57
      %p69 = scmp.eq.s32.totalorder %s26, 1
      %p70 = por %p68, %p69
      %p72 = scmp.ne.s32.totalorder %s57, %s71
      %p73 = scmp.eq.s32.totalorder %s26, 0
      %p74 = por %p72, %p73
      %s76 = sadd.s32 %s75, 1
      %p79 = scmp.eq.s32.totalorder %s20, 1
      %p80 = scmp.ne.s32.totalorder %s75, %s77
      %p81 = scmp.eq.s32.totalorder %s20, 0
      %p82 = por %p80, %p81
      %p83 = scmp.ne.s32.totalorder %s75, %s77
      %p84 = scmp.eq.s32.totalorder %s25, 1
      %p85 = por %p83, %p84
      %p86 = scmp.ne.s32.totalorder %s77, %s78
      %p87 = scmp.eq.s32.totalorder %s25, 0
      %p88 = por %p86, %p87
      %p89 = scmp.ne.s32.totalorder %s77, %s78
      %p90 = scmp.eq.s32.totalorder %s26, 1
      %p91 = por %p89, %p90
      %p93 = scmp.ne.s32.totalorder %s78, %s92
      %p94 = scmp.eq.s32.totalorder %s26, 0
      %p95 = por %p93, %p94
      %s97 = sadd.s32 %s96, 1
      %p100 = scmp.eq.s32.totalorder %s20, 1
      %p101 = scmp.ne.s32.totalorder %s96, %s98
      %p102 = scmp.eq.s32.totalorder %s20, 0
      %p103 = por %p101, %p102
      %p104 = scmp.ne.s32.totalorder %s96, %s98
      %p105 = scmp.eq.s32.totalorder %s25, 1
      %p106 = por %p104, %p105
      %p107 = scmp.ne.s32.totalorder %s98, %s99
      %p108 = scmp.eq.s32.totalorder %s25, 0
      %p109 = por %p107, %p108
      %p110 = scmp.ne.s32.totalorder %s98, %s99
      %p111 = scmp.eq.s32.totalorder %s26, 1
      %p112 = por %p110, %p111
      %p114 = scmp.ne.s32.totalorder %s99, %s113
      %p115 = scmp.eq.s32.totalorder %s26, 0
      %p116 = por %p114, %p115
      %s118 = sadd.s32 %s117, 1
      %p121 = scmp.eq.s32.totalorder %s20, 1
      %p122 = scmp.ne.s32.totalorder %s117, %s119
      %p123 = scmp.eq.s32.totalorder %s20, 0
      %p124 = por %p122, %p123
      %p125 = scmp.ne.s32.totalorder %s117, %s119
      %p126 = scmp.eq.s32.totalorder %s25, 1
      %p127 = por %p125, %p126
      %p128 = scmp.ne.s32.totalorder %s119, %s120
      %p129 = scmp.eq.s32.totalorder %s25, 0
      %p130 = por %p128, %p129
      %p131 = scmp.ne.s32.totalorder %s119, %s120
      %p132 = scmp.eq.s32.totalorder %s26, 1
      %p133 = por %p131, %p132
      %p135 = scmp.ne.s32.totalorder %s120, %s134
      %p136 = scmp.eq.s32.totalorder %s26, 0
      %p137 = por %p135, %p136
      %s139 = sadd.s32 %s138, 1
      %p142 = scmp.eq.s32.totalorder %s20, 1
      %p143 = scmp.ne.s32.totalorder %s138, %s140
      %p144 = scmp.eq.s32.totalorder %s20, 0
      %p145 = por %p143, %p144
      %p146 = scmp.ne.s32.totalorder %s138, %s140
      %p147 = scmp.eq.s32.totalorder %s25, 1
      %p148 = por %p146, %p147
      %p149 = scmp.ne.s32.totalorder %s140, %s141
      %p150 = scmp.eq.s32.totalorder %s25, 0
      %p151 = por %p149, %p150
      %p152 = scmp.ne.s32.totalorder %s140, %s141
      %p153 = scmp.eq.s32.totalorder %s26, 1
      %p154 = por %p152, %p153
      %p156 = scmp.ne.s32.totalorder %s141, %s155
      %p157 = scmp.eq.s32.totalorder %s26, 0
      %p158 = por %p156, %p157
      %s160 = sadd.s32 %s159, 1
      %p163 = scmp.eq.s32.totalorder %s20, 1
      %p164 = scmp.ne.s32.totalorder %s159, %s161
      %p165 = scmp.eq.s32.totalorder %s20, 0
      %p166 = por %p164, %p165
      %p167 = scmp.ne.s32.totalorder %s159, %s161
      %p168 = scmp.eq.s32.totalorder %s25, 1
      %p169 = por %p167, %p168
      %p170 = scmp.ne.s32.totalorder %s161, %s162
      %p171 = scmp.eq.s32.totalorder %s25, 0
      %p172 = por %p170, %p171
      %p173 = scmp.ne.s32.totalorder %s161, %s162
      %p174 = scmp.eq.s32.totalorder %s26, 1
      %p175 = por %p173, %p174
      %p177 = scmp.ne.s32.totalorder %s162, %s176
      %p178 = scmp.eq.s32.totalorder %s26, 0
      %p179 = por %p177, %p178
      %s181 = sadd.s32 %s180, 1
      %p184 = scmp.eq.s32.totalorder %s20, 1
      %p185 = scmp.ne.s32.totalorder %s180, %s182
      %p186 = scmp.eq.s32.totalorder %s20, 0
      %p187 = por %p185, %p186
      %p188 = scmp.ne.s32.totalorder %s180, %s182
      %p189 = scmp.eq.s32.totalorder %s25, 1
      %p190 = por %p188, %p189
      %p191 = scmp.ne.s32.totalorder %s182, %s183
      %p192 = scmp.eq.s32.totalorder %s25, 0
      %p193 = por %p191, %p192
      %p194 = scmp.ne.s32.totalorder %s182, %s183
      %p195 = scmp.eq.s32.totalorder %s26, 1
      %p196 = por %p194, %p195
      %p198 = scmp.ne.s32.totalorder %s183, %s197
      %p199 = scmp.eq.s32.totalorder %s26, 0
      %p200 = por %p198, %p199
      %s202 = sadd.s32 %s201, 1
      %p205 = scmp.eq.s32.totalorder %s20, 1
      %p206 = scmp.ne.s32.totalorder %s201, %s203
      %p207 = scmp.eq.s32.totalorder %s20, 0
      %p208 = por %p206, %p207
      %p209 = scmp.ne.s32.totalorder %s201, %s203
      %p210 = scmp.eq.s32.totalorder %s25, 1
      %p211 = por %p209, %p210
      %p212 = scmp.ne.s32.totalorder %s203, %s204
      %p213 = scmp.eq.s32.totalorder %s25, 0
      %p214 = por %p212, %p213
      %p215 = scmp.ne.s32.totalorder %s203, %s204
      %p216 = scmp.eq.s32.totalorder %s26, 1
      %p217 = por %p215, %p216
      %p219 = scmp.ne.s32.totalorder %s204, %s218
      %p220 = scmp.eq.s32.totalorder %s26, 0
      %p221 = por %p219, %p220
      %s222 = ssub.s32 %s20, %s27
      %p223 = scmp.eq.s32.totalorder %s222, 0
      %s225 = sadd.s32 %s224, 1
      %s226 = scalar_select %p223, %s224, %s225
      %p229 = pneg %p223
      %p230 = scmp.eq.s32.totalorder %s20, 1
      %p231 = por %p229, %p230
      %p232 = scmp.ne.s32.totalorder %s224, %s227
      %p233 = scmp.eq.s32.totalorder %s20, 0
      %p234 = por %p232, %p233
      %p235 = scmp.ne.s32.totalorder %s224, %s227
      %p236 = scmp.eq.s32.totalorder %s25, 1
      %p237 = por %p235, %p236
      %p238 = scmp.ne.s32.totalorder %s227, %s228
      %p239 = scmp.eq.s32.totalorder %s25, 0
      %p240 = por %p238, %p239
      %p241 = scmp.ne.s32.totalorder %s227, %s228
      %p242 = scmp.eq.s32.totalorder %s26, 1
      %p243 = por %p241, %p242
      %p245 = scmp.ne.s32.totalorder %s228, %s244
      %p246 = scmp.eq.s32.totalorder %s26, 0
      %p247 = por %p245, %p246
      %p248 = scmp.le.s32.totalorder 1, %s20
      %p249 = scmp.lt.s32.totalorder %s20, 3
      %p250 = pnand %p248, %p249
      %p251 = pneg %p250
      // Predicated region
      $region9: #{tpu_custom_call.1} parent=5 // pred_check
        _
      $region10: #{tpu_custom_call.1} parent=5 // pred_check_branch
        %253 = sbr.rel (%p250) target = $region12
      $region11: #{tpu_custom_call.1} parent=5 // pred_region
        %s254 = ssub.s32 %s20, 1
        // Predicated region
        $region13: #{tpu_custom_call.1} parent=11 // pred_check
          %p255 = pneg %p67
        $region14: #{tpu_custom_call.1} parent=11 // pred_check_branch
          %257 = sbr.rel (%p255) target = $region16
        $region15: #{tpu_custom_call.1} parent=11 // pred_region
          _
        $region16: #{tpu_custom_call.1} parent=11 // pred_fallthru
          _
        // Predicated region
        $region17: #{tpu_custom_call.1} parent=11 // pred_check
          %p258 = pneg %p88
        $region18: #{tpu_custom_call.1} parent=11 // pred_check_branch
          %260 = sbr.rel (%p258) target = $region20
        $region19: #{tpu_custom_call.1} parent=11 // pred_region
          _
        $region20: #{tpu_custom_call.1} parent=11 // pred_fallthru
          _
        // Predicated region
        $region21: #{tpu_custom_call.1} parent=11 // pred_check
          %p261 = pneg %p109
        $region22: #{tpu_custom_call.1} parent=11 // pred_check_branch
          %263 = sbr.rel (%p261) target = $region24
        $region23: #{tpu_custom_call.1} parent=11 // pred_region
          %s265 = ssub.s32 2048, 2048
          %266 = vsyncadd [#allocation3], %s265
          %s267 = sshll.u32 [#allocation2], 4
          %s268 = int_to_ptr.vmem [resolvable:$true] %s267
          %273 = dma.hbm_to_vmem [thread:$0]  %s3, 2048, %s268, [#allocation3], 64, 64, 4
        $region24: #{tpu_custom_call.1} parent=11 // pred_fallthru
          _
        // Predicated region
        $region25: #{tpu_custom_call.1} parent=11 // pred_check
          %p274 = pneg %p130
        $region26: #{tpu_custom_call.1} parent=11 // pred_check_branch
          %276 = sbr.rel (%p274) target = $region28
        $region27: #{tpu_custom_call.1} parent=11 // pred_region
          _
        $region28: #{tpu_custom_call.1} parent=11 // pred_fallthru
          _
        // Predicated region
        $region29: #{tpu_custom_call.1} parent=11 // pred_check
          %p277 = pneg %p151
        $region30: #{tpu_custom_call.1} parent=11 // pred_check_branch
          %279 = sbr.rel (%p277) target = $region32
        $region31: #{tpu_custom_call.1} parent=11 // pred_region
          %s281 = ssub.s32 1024, 1024
          %282 = vsyncadd [#allocation6], %s281
          %s283 = sshll.u32 [#allocation5], 4
          %s284 = int_to_ptr.vmem [resolvable:$true] %s283
          %289 = dma.hbm_to_vmem [thread:$0]  %s5, 1024, %s284, [#allocation6], 64, 64, 4
        $region32: #{tpu_custom_call.1} parent=11 // pred_fallthru
          _
        // Predicated region
        $region33: #{tpu_custom_call.1} parent=11 // pred_check
          %p290 = pneg %p172
        $region34: #{tpu_custom_call.1} parent=11 // pred_check_branch
          %292 = sbr.rel (%p290) target = $region36
        $region35: #{tpu_custom_call.1} parent=11 // pred_region
          _
        $region36: #{tpu_custom_call.1} parent=11 // pred_fallthru
          _
        // Predicated region
        $region37: #{tpu_custom_call.1} parent=11 // pred_check
          %p293 = pneg %p193
        $region38: #{tpu_custom_call.1} parent=11 // pred_check_branch
          %295 = sbr.rel (%p293) target = $region40
        $region39: #{tpu_custom_call.1} parent=11 // pred_region
          %s297 = ssub.s32 2048, 2048
          %298 = vsyncadd [#allocation6], %s297
          %s299 = sshll.u32 [#allocation7], 4
          %s300 = int_to_ptr.vmem [resolvable:$true] %s299
          %305 = dma.hbm_to_vmem [thread:$0]  %s7, 2048, %s300, [#allocation6], 128, 128, 8
        $region40: #{tpu_custom_call.1} parent=11 // pred_fallthru
          _
        // Predicated region
        $region41: #{tpu_custom_call.1} parent=11 // pred_check
          %p306 = pneg %p214
        $region42: #{tpu_custom_call.1} parent=11 // pred_check_branch
          %308 = sbr.rel (%p306) target = $region44
        $region43: #{tpu_custom_call.1} parent=11 // pred_region
          _
        $region44: #{tpu_custom_call.1} parent=11 // pred_fallthru
          _
      $region12: #{tpu_custom_call.1} parent=5 // pred_fallthru
        _
      %p309 = scmp.lt.s32.totalorder %s20, 2
      // Predicated region
      $region45: #{tpu_custom_call.1} parent=5 // pred_check
        %p310 = pneg %p309
      $region46: #{tpu_custom_call.1} parent=5 // pred_check_branch
        %312 = sbr.rel (%p310) target = $region48
      $region47: #{tpu_custom_call.1} parent=5 // pred_region
        // Predicated region
        $region49: #{tpu_custom_call.1} parent=47 // pred_check
          %p313 = pneg %p40
        $region50: #{tpu_custom_call.1} parent=47 // pred_check_branch
          %315 = sbr.rel (%p313) target = $region52
        $region51: #{tpu_custom_call.1} parent=47 // pred_region
          %s316 = smul.u32 4, %s20
          %p317 = scmp.lt.s32.totalorder %s316, 7
          %s318 = scalar_select %p317, %s316, 7
          %s319 = smul.addr %s318, 4
          %s320 = scalar_lea.vmem %s0, %s319
          %s321 = smul.u32 4, %s20
        $region52: #{tpu_custom_call.1} parent=47 // pred_fallthru
          _
      $region48: #{tpu_custom_call.1} parent=5 // pred_fallthru
        _
      %p322 = scmp.le.s32.totalorder 1, %s20
      %p323 = scmp.lt.s32.totalorder %s20, 3
      %p324 = pnand %p322, %p323
      %p325 = pneg %p324
      // Predicated region
      $region53: #{tpu_custom_call.1} parent=5 // pred_check
        _
      $region54: #{tpu_custom_call.1} parent=5 // pred_check_branch
        %327 = sbr.rel (%p324) target = $region56
      $region55: #{tpu_custom_call.1} parent=5 // pred_region
        %s328 = ssub.s32 %s20, 1
        // Predicated region
        $region57: #{tpu_custom_call.1} parent=55 // pred_check
          %p329 = pneg %p109
        $region58: #{tpu_custom_call.1} parent=55 // pred_check_branch
          %331 = sbr.rel (%p329) target = $region60
        $region59: #{tpu_custom_call.1} parent=55 // pred_region
          %332 = dma.done [#allocation3], 2048
        $region60: #{tpu_custom_call.1} parent=55 // pred_fallthru
          _
        // Predicated region
        $region61: #{tpu_custom_call.1} parent=55 // pred_check
          %p333 = pneg %p151
        $region62: #{tpu_custom_call.1} parent=55 // pred_check_branch
          %335 = sbr.rel (%p333) target = $region64
        $region63: #{tpu_custom_call.1} parent=55 // pred_region
          %336 = dma.done [#allocation6], 1024
        $region64: #{tpu_custom_call.1} parent=55 // pred_fallthru
          _
        // Predicated region
        $region65: #{tpu_custom_call.1} parent=55 // pred_check
          %p337 = pneg %p193
        $region66: #{tpu_custom_call.1} parent=55 // pred_check_branch
          %339 = sbr.rel (%p337) target = $region68
        $region67: #{tpu_custom_call.1} parent=55 // pred_region
          %340 = dma.done [#allocation6], 2048
        $region68: #{tpu_custom_call.1} parent=55 // pred_fallthru
          _
        %s341 = smul.u32 4, %s25
        %p342 = scmp.lt.s32.totalorder %s341, 7
        %s343 = scalar_select %p342, %s341, 7
        %s344 = smul.addr %s343, 4
        %s345 = scalar_lea.vmem %s0, %s344
        %p346 = pneg %p46
        %p347 = pneg %p43
        %p348 = pneg %p67
        %p349 = pneg %p64
        %p350 = pneg %p88
        %p351 = pneg %p85
        %p352 = pneg %p109
        %p353 = pneg %p106
        %p354 = pneg %p130
        %p355 = pneg %p127
        %p356 = pneg %p151
        %p357 = pneg %p148
        %p358 = pneg %p172
        %p359 = pneg %p169
        %p360 = pneg %p193
        %p361 = pneg %p190
        %p362 = pneg %p214
        %p363 = pneg %p211
        %p364 = pneg %p240
        %p365 = pneg %p237
        %s366 = sand.u32 %s227, 1
        %s367 = scalar_lea.sflag [#allocation4], %s366
        %s368 = sand.u32 %s227, 1
        %s369 = smul.addr %s368, 64
        %s370 = scalar_lea.vmem [#allocation8], %s369
        %s371 = smul.u32 4, %s25
        %p372 = scmp.lt.s32.totalorder %s371, 7
        %s373 = scalar_select %p372, %s371, 7
        %s374 = smul.addr %s373, 4
        %s375 = scalar_lea.vmem %s0, %s374
        %s376 = smul.u32 4, %s25
        %s377 = smul.u32 4, %s25
        %v379 = vld [vmem:[%s375] sm:$0xf]
        %v380 = vld [vmem:[%s375 + $0x4] sm:$0xf]
        %v381 = vld [vmem:[%s375 + $0x8] sm:$0xf]
        %v382 = vld [vmem:[%s375 + $0xc] sm:$0xf]
        %v383 = vld [vmem:[%s1] sm:$0xff]
        %v384 = vld [vmem:[%s1 + $0x8] sm:$0xff]
        %v385 = vld [vmem:[%s2] sm:$0x3]
        %v387 = vlaneseq
        %v388 = vshrl.u32 %v387, 7
        %v389 = vsub.s32 0, %v388
        %v390 = vrot.slane %v385, %v389
        %v391 = vlaneseq
        %v392 = vshrl.u32 %v391, 7
        %v393 = vsub.s32 1, %v392
        %v394 = vrot.slane %v385, %v393
        %v401 = vunpack.c.l.b16 %v379
        %v402 = vunpack.c.l.b16 %v380
        %v403 = vunpack.c.l.b16 %v381
        %v404 = vunpack.c.l.b16 %v382
        %v405 = vpack.c.b16 %v402, %v401
        %v406 = vpack.c.b16 %v404, %v403
        %v409 = vunpack.c.l.b16 %v383
        %v410 = vunpack.c.h.b16 %v383
        %v411 = vunpack.c.l.b16 %v384
        %v412 = vunpack.c.h.b16 %v384
        %v413 = vpack.c.b16 %v411, %v409
        %v414 = vpack.c.b16 %v412, %v410
        %vm417 = vcmask 130048
        %v419 = vsel %vm417, %v405, 0
        %v422 = vsel %vm417, %v406, 0
        %424 = vmatprep.subr.bf16.mxu0 %v414
        %425 = vmatpush1.bf16.msra.mxu0 %v413
        %426 = vmatprep.subr.bf16.mxu0 0
        %427 = vmatpush1.bf16.msra.mxu0 0
        %428 = vmatprep.subr.bf16.mxu0 0
        %429 = vmatpush1.bf16.msra.mxu0 0
        %430 = vmatprep.subr.bf16.mxu0 0
        %431 = vmatpush1.bf16.msra.mxu0 0
        %432 = vmatprep.subr.bf16.mxu0 0
        %433 = vmatpush1.bf16.msra.mxu0 0
        %434 = vmatprep.subr.bf16.mxu0 0
        %435 = vmatpush1.bf16.msra.mxu0 0
        %436 = vmatprep.subr.bf16.mxu0 0
        %437 = vmatpush1.bf16.msra.mxu0 0
        %438 = vmatprep.subr.bf16.mxu0 0
        %439 = vmatpush1.bf16.msra.mxu0 0
        %440 = vmatprep.subr.bf16.mxu0 0
        %441 = vmatpush1.bf16.msra.mxu0 0
        %442 = vmatprep.subr.bf16.mxu0 0
        %443 = vmatpush1.bf16.msra.mxu0 0
        %444 = vmatprep.subr.bf16.mxu0 0
        %445 = vmatpush1.bf16.msra.mxu0 0
        %446 = vmatprep.subr.bf16.mxu0 0
        %447 = vmatpush1.bf16.msra.mxu0 0
        %448 = vmatprep.subr.bf16.mxu0 0
        %449 = vmatpush1.bf16.msra.mxu0 0
        %450 = vmatprep.subr.bf16.mxu0 0
        %451 = vmatpush1.bf16.msra.mxu0 0
        %452 = vmatprep.subr.bf16.mxu0 0
        %453 = vmatpush1.bf16.msra.mxu0 0
        %454 = vmatprep.subr.bf16.mxu0 0
        %455 = vmatpush1.bf16.msra.mxu0 0
        %456 = vmatprep.mubr.bf16.mxu0 0
        %457 = vmatmul.mubr.bf16.gmra.mrb[0].mxu0 %v419
        %v458 = vpop.f32.mrb[0].mxu0
        %v459 = vadd.f32 %v390, %v458
        %v460 = vpop.f32.mrb[0].mxu0
        %v461 = vadd.f32 %v394, %v460
        %v462 = vpop.f32.mrb[0].mxu0
        %v463 = vadd.f32 %v390, %v462
        %v464 = vpop.f32.mrb[0].mxu0
        %v465 = vadd.f32 %v394, %v464
        %466 = vmatprep.mubr.bf16.mxu0 0
        %467 = vmatmul.mubr.bf16.gmra.mrb[0].mxu0 %v422
        %v468 = vpop.f32.mrb[0].mxu0
        %v469 = vadd.f32 %v390, %v468
        %v470 = vpop.f32.mrb[0].mxu0
        %v471 = vadd.f32 %v394, %v470
        %v472 = vpop.f32.mrb[0].mxu0
        %v473 = vadd.f32 %v390, %v472
        %v474 = vpop.f32.mrb[0].mxu0
        %v475 = vadd.f32 %v394, %v474
        %476 = vdwg.mxu0
        %v477 = vmax.f32 %v459, 0.0
        %v478 = vmax.f32 %v461, 0.0
        %v479 = vmax.f32 %v463, 0.0
        %v480 = vmax.f32 %v465, 0.0
        %v481 = vmax.f32 %v469, 0.0
        %v482 = vmax.f32 %v471, 0.0
        %v483 = vmax.f32 %v473, 0.0
        %v484 = vmax.f32 %v475, 0.0
        %v485 = vpack.c.bf16 %v479, %v477
        %v486 = vpack.c.bf16 %v480, %v478
        %v487 = vpack.c.bf16 %v483, %v481
        %v488 = vpack.c.bf16 %v484, %v482
        %v489 = vld [vmem:[#allocation2] sm:$0xf]
        %v490 = vld [vmem:[#allocation2 + $0x4] sm:$0xf]
        %v491 = vld [vmem:[#allocation2 + $0x8] sm:$0xf]
        %v492 = vld [vmem:[#allocation2 + $0xc] sm:$0xf]
        %v493 = vld [vmem:[#allocation2 + $0x10] sm:$0xf]
        %v494 = vld [vmem:[#allocation2 + $0x14] sm:$0xf]
        %v495 = vld [vmem:[#allocation2 + $0x18] sm:$0xf]
        %v496 = vld [vmem:[#allocation2 + $0x1c] sm:$0xf]
        %v497 = vld [vmem:[#allocation2 + $0x20] sm:$0xf]
        %v498 = vld [vmem:[#allocation2 + $0x24] sm:$0xf]
        %v499 = vld [vmem:[#allocation2 + $0x28] sm:$0xf]
        %v500 = vld [vmem:[#allocation2 + $0x2c] sm:$0xf]
        %v501 = vld [vmem:[#allocation2 + $0x30] sm:$0xf]
        %v502 = vld [vmem:[#allocation2 + $0x34] sm:$0xf]
        %v503 = vld [vmem:[#allocation2 + $0x38] sm:$0xf]
        %v504 = vld [vmem:[#allocation2 + $0x3c] sm:$0xf]
        %v505 = vld [vmem:[#allocation2 + $0x40] sm:$0xf]
        %v506 = vld [vmem:[#allocation2 + $0x44] sm:$0xf]
        %v507 = vld [vmem:[#allocation2 + $0x48] sm:$0xf]
        %v508 = vld [vmem:[#allocation2 + $0x4c] sm:$0xf]
        %v509 = vld [vmem:[#allocation2 + $0x50] sm:$0xf]
        %v510 = vld [vmem:[#allocation2 + $0x54] sm:$0xf]
        %v511 = vld [vmem:[#allocation2 + $0x58] sm:$0xf]
        %v512 = vld [vmem:[#allocation2 + $0x5c] sm:$0xf]
        %v513 = vld [vmem:[#allocation2 + $0x60] sm:$0xf]
        %v514 = vld [vmem:[#allocation2 + $0x64] sm:$0xf]
        %v515 = vld [vmem:[#allocation2 + $0x68] sm:$0xf]
        %v516 = vld [vmem:[#allocation2 + $0x6c] sm:$0xf]
        %v517 = vld [vmem:[#allocation2 + $0x70] sm:$0xf]
        %v518 = vld [vmem:[#allocation2 + $0x74] sm:$0xf]
        %v519 = vld [vmem:[#allocation2 + $0x78] sm:$0xf]
        %v520 = vld [vmem:[#allocation2 + $0x7c] sm:$0xf]
        %v521 = vld [vmem:[%s4] sm:$0x1]
        %v523 = vlaneseq
        %v524 = vshrl.u32 %v523, 7
        %v525 = vsub.s32 0, %v524
        %v526 = vrot.slane %v521, %v525
        %v560 = vunpack.c.l.b16 %v489
        %v561 = vunpack.c.l.b16 %v490
        %v562 = vunpack.c.l.b16 %v491
        %v563 = vunpack.c.l.b16 %v492
        %v564 = vunpack.c.l.b16 %v493
        %v565 = vunpack.c.l.b16 %v494
        %v566 = vunpack.c.l.b16 %v495
        %v567 = vunpack.c.l.b16 %v496
        %v568 = vunpack.c.l.b16 %v497
        %v569 = vunpack.c.l.b16 %v498
        %v570 = vunpack.c.l.b16 %v499
        %v571 = vunpack.c.l.b16 %v500
        %v572 = vunpack.c.l.b16 %v501
        %v573 = vunpack.c.l.b16 %v502
        %v574 = vunpack.c.l.b16 %v503
        %v575 = vunpack.c.l.b16 %v504
        %v576 = vunpack.c.l.b16 %v505
        %v577 = vunpack.c.l.b16 %v506
        %v578 = vunpack.c.l.b16 %v507
        %v579 = vunpack.c.l.b16 %v508
        %v580 = vunpack.c.l.b16 %v509
        %v581 = vunpack.c.l.b16 %v510
        %v582 = vunpack.c.l.b16 %v511
        %v583 = vunpack.c.l.b16 %v512
        %v584 = vunpack.c.l.b16 %v513
        %v585 = vunpack.c.l.b16 %v514
        %v586 = vunpack.c.l.b16 %v515
        %v587 = vunpack.c.l.b16 %v516
        %v588 = vunpack.c.l.b16 %v517
        %v589 = vunpack.c.l.b16 %v518
        %v590 = vunpack.c.l.b16 %v519
        %v591 = vunpack.c.l.b16 %v520
        %v592 = vpack.c.b16 %v561, %v560
        %v593 = vpack.c.b16 %v563, %v562
        %v594 = vpack.c.b16 %v565, %v564
        %v595 = vpack.c.b16 %v567, %v566
        %v596 = vpack.c.b16 %v569, %v568
        %v597 = vpack.c.b16 %v571, %v570
        %v598 = vpack.c.b16 %v573, %v572
        %v599 = vpack.c.b16 %v575, %v574
        %v600 = vpack.c.b16 %v577, %v576
        %v601 = vpack.c.b16 %v579, %v578
        %v602 = vpack.c.b16 %v581, %v580
        %v603 = vpack.c.b16 %v583, %v582
        %v604 = vpack.c.b16 %v585, %v584
        %v605 = vpack.c.b16 %v587, %v586
        %v606 = vpack.c.b16 %v589, %v588
        %v607 = vpack.c.b16 %v591, %v590
        %624 = vmatprep.subr.bf16.mxu0 0
        %625 = vmatpush1.bf16.msra.mxu0 %v592
        %626 = vmatprep.subr.bf16.mxu0 0
        %627 = vmatpush1.bf16.msra.mxu0 %v593
        %628 = vmatprep.subr.bf16.mxu0 0
        %629 = vmatpush1.bf16.msra.mxu0 %v594
        %630 = vmatprep.subr.bf16.mxu0 0
        %631 = vmatpush1.bf16.msra.mxu0 %v595
        %632 = vmatprep.subr.bf16.mxu0 0
        %633 = vmatpush1.bf16.msra.mxu0 %v596
        %634 = vmatprep.subr.bf16.mxu0 0
        %635 = vmatpush1.bf16.msra.mxu0 %v597
        %636 = vmatprep.subr.bf16.mxu0 0
        %637 = vmatpush1.bf16.msra.mxu0 %v598
        %638 = vmatprep.subr.bf16.mxu0 0
        %639 = vmatpush1.bf16.msra.mxu0 %v599
        %640 = vmatprep.subr.bf16.mxu0 0
        %641 = vmatpush1.bf16.msra.mxu0 %v600
        %642 = vmatprep.subr.bf16.mxu0 0
        %643 = vmatpush1.bf16.msra.mxu0 %v601
        %644 = vmatprep.subr.bf16.mxu0 0
        %645 = vmatpush1.bf16.msra.mxu0 %v602
        %646 = vmatprep.subr.bf16.mxu0 0
        %647 = vmatpush1.bf16.msra.mxu0 %v603
        %648 = vmatprep.subr.bf16.mxu0 0
        %649 = vmatpush1.bf16.msra.mxu0 %v604
        %650 = vmatprep.subr.bf16.mxu0 0
        %651 = vmatpush1.bf16.msra.mxu0 %v605
        %652 = vmatprep.subr.bf16.mxu0 0
        %653 = vmatpush1.bf16.msra.mxu0 %v606
        %654 = vmatprep.subr.bf16.mxu0 0
        %655 = vmatpush1.bf16.msra.mxu0 %v607
        %656 = vmatprep.mubr.bf16.mxu0 %v486
        %657 = vmatmul.mubr.bf16.gmra.mrb[0].mxu0 %v485
        %v658 = vpop.f32.mrb[0].mxu0
        %v659 = vadd.f32 %v526, %v658
        %v660 = vpop.f32.mrb[0].mxu0
        %v661 = vpop.f32.mrb[0].mxu0
        %v662 = vadd.f32 %v526, %v661
        %v663 = vpop.f32.mrb[0].mxu0
        %664 = vmatprep.mubr.bf16.mxu0 %v488
        %665 = vmatmul.mubr.bf16.gmra.mrb[0].mxu0 %v487
        %v666 = vpop.f32.mrb[0].mxu0
        %v667 = vadd.f32 %v526, %v666
        %v668 = vpop.f32.mrb[0].mxu0
        %v669 = vpop.f32.mrb[0].mxu0
        %v670 = vadd.f32 %v526, %v669
        %v671 = vpop.f32.mrb[0].mxu0
        %672 = vdwg.mxu0
        %v673 = vmax.f32 %v659, 0.0
        %v674 = vmax.f32 %v662, 0.0
        %v675 = vmax.f32 %v667, 0.0
        %v676 = vmax.f32 %v670, 0.0
        %v677 = vpack.c.bf16 %v674, %v673
        %v678 = vpack.c.bf16 %v676, %v675
        %v679 = vld [vmem:[#allocation5] sm:$0xf]
        %v680 = vld [vmem:[#allocation5 + $0x4] sm:$0xf]
        %v681 = vld [vmem:[#allocation5 + $0x8] sm:$0xf]
        %v682 = vld [vmem:[#allocation5 + $0xc] sm:$0xf]
        %v683 = vld [vmem:[#allocation5 + $0x10] sm:$0xf]
        %v684 = vld [vmem:[#allocation5 + $0x14] sm:$0xf]
        %v685 = vld [vmem:[#allocation5 + $0x18] sm:$0xf]
        %v686 = vld [vmem:[#allocation5 + $0x1c] sm:$0xf]
        %v687 = vld [vmem:[#allocation5 + $0x20] sm:$0xf]
        %v688 = vld [vmem:[#allocation5 + $0x24] sm:$0xf]
        %v689 = vld [vmem:[#allocation5 + $0x28] sm:$0xf]
        %v690 = vld [vmem:[#allocation5 + $0x2c] sm:$0xf]
        %v691 = vld [vmem:[#allocation5 + $0x30] sm:$0xf]
        %v692 = vld [vmem:[#allocation5 + $0x34] sm:$0xf]
        %v693 = vld [vmem:[#allocation5 + $0x38] sm:$0xf]
        %v694 = vld [vmem:[#allocation5 + $0x3c] sm:$0xf]
        %v695 = vld [vmem:[%s6] sm:$0x1]
        %v697 = vlaneseq
        %v698 = vshrl.u32 %v697, 7
        %v699 = vsub.s32 0, %v698
        %v700 = vrot.slane %v695, %v699
        %v718 = vunpack.c.l.b16 %v679
        %v719 = vunpack.c.l.b16 %v680
        %v720 = vunpack.c.l.b16 %v681
        %v721 = vunpack.c.l.b16 %v682
        %v722 = vunpack.c.l.b16 %v683
        %v723 = vunpack.c.l.b16 %v684
        %v724 = vunpack.c.l.b16 %v685
        %v725 = vunpack.c.l.b16 %v686
        %v726 = vunpack.c.l.b16 %v687
        %v727 = vunpack.c.l.b16 %v688
        %v728 = vunpack.c.l.b16 %v689
        %v729 = vunpack.c.l.b16 %v690
        %v730 = vunpack.c.l.b16 %v691
        %v731 = vunpack.c.l.b16 %v692
        %v732 = vunpack.c.l.b16 %v693
        %v733 = vunpack.c.l.b16 %v694
        %v734 = vpack.c.b16 %v719, %v718
        %v735 = vpack.c.b16 %v721, %v720
        %v736 = vpack.c.b16 %v723, %v722
        %v737 = vpack.c.b16 %v725, %v724
        %v738 = vpack.c.b16 %v727, %v726
        %v739 = vpack.c.b16 %v729, %v728
        %v740 = vpack.c.b16 %v731, %v730
        %v741 = vpack.c.b16 %v733, %v732
        %750 = vmatprep.subr.bf16.mxu0 0
        %751 = vmatpush1.bf16.msra.mxu0 %v734
        %752 = vmatprep.subr.bf16.mxu0 0
        %753 = vmatpush1.bf16.msra.mxu0 %v735
        %754 = vmatprep.subr.bf16.mxu0 0
        %755 = vmatpush1.bf16.msra.mxu0 %v736
        %756 = vmatprep.subr.bf16.mxu0 0
        %757 = vmatpush1.bf16.msra.mxu0 %v737
        %758 = vmatprep.subr.bf16.mxu0 0
        %759 = vmatpush1.bf16.msra.mxu0 %v738
        %760 = vmatprep.subr.bf16.mxu0 0
        %761 = vmatpush1.bf16.msra.mxu0 %v739
        %762 = vmatprep.subr.bf16.mxu0 0
        %763 = vmatpush1.bf16.msra.mxu0 %v740
        %764 = vmatprep.subr.bf16.mxu0 0
        %765 = vmatpush1.bf16.msra.mxu0 %v741
        %766 = vmatprep.subr.bf16.mxu0 0
        %767 = vmatpush1.bf16.msra.mxu0 0
        %768 = vmatprep.subr.bf16.mxu0 0
        %769 = vmatpush1.bf16.msra.mxu0 0
        %770 = vmatprep.subr.bf16.mxu0 0
        %771 = vmatpush1.bf16.msra.mxu0 0
        %772 = vmatprep.subr.bf16.mxu0 0
        %773 = vmatpush1.bf16.msra.mxu0 0
        %774 = vmatprep.subr.bf16.mxu0 0
        %775 = vmatpush1.bf16.msra.mxu0 0
        %776 = vmatprep.subr.bf16.mxu0 0
        %777 = vmatpush1.bf16.msra.mxu0 0
        %778 = vmatprep.subr.bf16.mxu0 0
        %779 = vmatpush1.bf16.msra.mxu0 0
        %780 = vmatprep.subr.bf16.mxu0 0
        %781 = vmatpush1.bf16.msra.mxu0 0
        %782 = vmatprep.mubr.bf16.mxu0 0
        %783 = vmatmul.mubr.bf16.gmra.mrb[0].mxu0 %v677
        %v784 = vpop.f32.mrb[0].mxu0
        %v785 = vadd.f32 %v700, %v784
        %v786 = vpop.f32.mrb[0].mxu0
        %v787 = vpop.f32.mrb[0].mxu0
        %v788 = vadd.f32 %v700, %v787
        %v789 = vpop.f32.mrb[0].mxu0
        %790 = vmatprep.mubr.bf16.mxu0 0
        %791 = vmatmul.mubr.bf16.gmra.mrb[0].mxu0 %v678
        %v792 = vpop.f32.mrb[0].mxu0
        %v793 = vadd.f32 %v700, %v792
        %v794 = vpop.f32.mrb[0].mxu0
        %v795 = vpop.f32.mrb[0].mxu0
        %v796 = vadd.f32 %v700, %v795
        %v797 = vpop.f32.mrb[0].mxu0
        %798 = vdwg.mxu0
        %v799 = vmax.f32 %v785, 0.0
        %v800 = vmax.f32 %v788, 0.0
        %v801 = vmax.f32 %v793, 0.0
        %v802 = vmax.f32 %v796, 0.0
        %v803 = vpack.c.bf16 %v800, %v799
        %v804 = vpack.c.bf16 %v802, %v801
        %v805 = vld [vmem:[#allocation7] sm:$0xff]
        %v806 = vld [vmem:[#allocation7 + $0x8] sm:$0xff]
        %v807 = vld [vmem:[#allocation7 + $0x10] sm:$0xff]
        %v808 = vld [vmem:[#allocation7 + $0x18] sm:$0xff]
        %v809 = vld [vmem:[#allocation7 + $0x20] sm:$0xff]
        %v810 = vld [vmem:[#allocation7 + $0x28] sm:$0xff]
        %v811 = vld [vmem:[#allocation7 + $0x30] sm:$0xff]
        %v812 = vld [vmem:[#allocation7 + $0x38] sm:$0xff]
        %v813 = vld [vmem:[#allocation7 + $0x40] sm:$0xff]
        %v814 = vld [vmem:[#allocation7 + $0x48] sm:$0xff]
        %v815 = vld [vmem:[#allocation7 + $0x50] sm:$0xff]
        %v816 = vld [vmem:[#allocation7 + $0x58] sm:$0xff]
        %v817 = vld [vmem:[#allocation7 + $0x60] sm:$0xff]
        %v818 = vld [vmem:[#allocation7 + $0x68] sm:$0xff]
        %v819 = vld [vmem:[#allocation7 + $0x70] sm:$0xff]
        %v820 = vld [vmem:[#allocation7 + $0x78] sm:$0xff]
        %v821 = vld [vmem:[%s8] sm:$0x3]
        %v823 = vlaneseq
        %v824 = vshrl.u32 %v823, 7
        %v825 = vsub.s32 0, %v824
        %v826 = vrot.slane %v821, %v825
        %v827 = vlaneseq
        %v828 = vshrl.u32 %v827, 7
        %v829 = vsub.s32 1, %v828
        %v830 = vrot.slane %v821, %v829
        %v849 = vunpack.c.l.b16 %v805
        %v850 = vunpack.c.h.b16 %v805
        %v851 = vunpack.c.l.b16 %v806
        %v852 = vunpack.c.h.b16 %v806
        %v853 = vunpack.c.l.b16 %v807
        %v854 = vunpack.c.h.b16 %v807
        %v855 = vunpack.c.l.b16 %v808
        %v856 = vunpack.c.h.b16 %v808
        %v857 = vunpack.c.l.b16 %v809
        %v858 = vunpack.c.h.b16 %v809
        %v859 = vunpack.c.l.b16 %v810
        %v860 = vunpack.c.h.b16 %v810
        %v861 = vunpack.c.l.b16 %v811
        %v862 = vunpack.c.h.b16 %v811
        %v863 = vunpack.c.l.b16 %v812
        %v864 = vunpack.c.h.b16 %v812
        %v865 = vunpack.c.l.b16 %v813
        %v866 = vunpack.c.h.b16 %v813
        %v867 = vunpack.c.l.b16 %v814
        %v868 = vunpack.c.h.b16 %v814
        %v869 = vunpack.c.l.b16 %v815
        %v870 = vunpack.c.h.b16 %v815
        %v871 = vunpack.c.l.b16 %v816
        %v872 = vunpack.c.h.b16 %v816
        %v873 = vunpack.c.l.b16 %v817
        %v874 = vunpack.c.h.b16 %v817
        %v875 = vunpack.c.l.b16 %v818
        %v876 = vunpack.c.h.b16 %v818
        %v877 = vunpack.c.l.b16 %v819
        %v878 = vunpack.c.h.b16 %v819
        %v879 = vunpack.c.l.b16 %v820
        %v880 = vunpack.c.h.b16 %v820
        %v881 = vpack.c.b16 %v851, %v849
        %v882 = vpack.c.b16 %v852, %v850
        %v883 = vpack.c.b16 %v855, %v853
        %v884 = vpack.c.b16 %v856, %v854
        %v885 = vpack.c.b16 %v859, %v857
        %v886 = vpack.c.b16 %v860, %v858
        %v887 = vpack.c.b16 %v863, %v861
        %v888 = vpack.c.b16 %v864, %v862
        %v889 = vpack.c.b16 %v867, %v865
        %v890 = vpack.c.b16 %v868, %v866
        %v891 = vpack.c.b16 %v871, %v869
        %v892 = vpack.c.b16 %v872, %v870
        %v893 = vpack.c.b16 %v875, %v873
        %v894 = vpack.c.b16 %v876, %v874
        %v895 = vpack.c.b16 %v879, %v877
        %v896 = vpack.c.b16 %v880, %v878
        %913 = vmatprep.subr.bf16.mxu0 %v882
        %914 = vmatpush1.bf16.msra.mxu0 %v881
        %915 = vmatprep.subr.bf16.mxu0 %v884
        %916 = vmatpush1.bf16.msra.mxu0 %v883
        %917 = vmatprep.subr.bf16.mxu0 %v886
        %918 = vmatpush1.bf16.msra.mxu0 %v885
        %919 = vmatprep.subr.bf16.mxu0 %v888
        %920 = vmatpush1.bf16.msra.mxu0 %v887
        %921 = vmatprep.subr.bf16.mxu0 %v890
        %922 = vmatpush1.bf16.msra.mxu0 %v889
        %923 = vmatprep.subr.bf16.mxu0 %v892
        %924 = vmatpush1.bf16.msra.mxu0 %v891
        %925 = vmatprep.subr.bf16.mxu0 %v894
        %926 = vmatpush1.bf16.msra.mxu0 %v893
        %927 = vmatprep.subr.bf16.mxu0 %v896
        %928 = vmatpush1.bf16.msra.mxu0 %v895
        %929 = vmatprep.subr.bf16.mxu0 0
        %930 = vmatpush1.bf16.msra.mxu0 0
        %931 = vmatprep.subr.bf16.mxu0 0
        %932 = vmatpush1.bf16.msra.mxu0 0
        %933 = vmatprep.subr.bf16.mxu0 0
        %934 = vmatpush1.bf16.msra.mxu0 0
        %935 = vmatprep.subr.bf16.mxu0 0
        %936 = vmatpush1.bf16.msra.mxu0 0
        %937 = vmatprep.subr.bf16.mxu0 0
        %938 = vmatpush1.bf16.msra.mxu0 0
        %939 = vmatprep.subr.bf16.mxu0 0
        %940 = vmatpush1.bf16.msra.mxu0 0
        %941 = vmatprep.subr.bf16.mxu0 0
        %942 = vmatpush1.bf16.msra.mxu0 0
        %943 = vmatprep.subr.bf16.mxu0 0
        %944 = vmatpush1.bf16.msra.mxu0 0
        %945 = vmatprep.mubr.bf16.mxu0 0
        %946 = vmatmul.mubr.bf16.gmra.mrb[0].mxu0 %v803
        %v947 = vpop.f32.mrb[0].mxu0
        %v948 = vadd.f32 %v826, %v947
        %v949 = vpop.f32.mrb[0].mxu0
        %v950 = vadd.f32 %v830, %v949
        %v951 = vpop.f32.mrb[0].mxu0
        %v952 = vadd.f32 %v826, %v951
        %v953 = vpop.f32.mrb[0].mxu0
        %v954 = vadd.f32 %v830, %v953
        %955 = vmatprep.mubr.bf16.mxu0 0
        %956 = vmatmul.mubr.bf16.gmra.mrb[0].mxu0 %v804
        %v957 = vpop.f32.mrb[0].mxu0
        %v958 = vadd.f32 %v826, %v957
        %v959 = vpop.f32.mrb[0].mxu0
        %v960 = vadd.f32 %v830, %v959
        %v961 = vpop.f32.mrb[0].mxu0
        %v962 = vadd.f32 %v826, %v961
        %v963 = vpop.f32.mrb[0].mxu0
        %v964 = vadd.f32 %v830, %v963
        %965 = vdwg.mxu0
        %v966 = vxor.u32 %v948, 2147483648
        %v967 = vxor.u32 %v950, 2147483648
        %v968 = vxor.u32 %v952, 2147483648
        %v969 = vxor.u32 %v954, 2147483648
        %v970 = vxor.u32 %v958, 2147483648
        %v971 = vxor.u32 %v960, 2147483648
        %v972 = vxor.u32 %v962, 2147483648
        %v973 = vxor.u32 %v964, 2147483648
        %v974 = vmul.f32 %v966, 1.442695
        %v975 = vpow.pop %v974
        %v976 = vmul.f32 %v967, 1.442695
        %v977 = vpow.pop %v976
        %v978 = vmul.f32 %v968, 1.442695
        %v979 = vpow.pop %v978
        %v980 = vmul.f32 %v969, 1.442695
        %v981 = vpow.pop %v980
        %v982 = vmul.f32 %v970, 1.442695
        %v983 = vpow.pop %v982
        %v984 = vmul.f32 %v971, 1.442695
        %v985 = vpow.pop %v984
        %v986 = vmul.f32 %v972, 1.442695
        %v987 = vpow.pop %v986
        %v988 = vmul.f32 %v973, 1.442695
        %v989 = vpow.pop %v988
        %v990 = vadd.f32 %v975, 1.0
        %v991 = vadd.f32 %v977, 1.0
        %v992 = vadd.f32 %v979, 1.0
        %v993 = vadd.f32 %v981, 1.0
        %v994 = vadd.f32 %v983, 1.0
        %v995 = vadd.f32 %v985, 1.0
        %v996 = vadd.f32 %v987, 1.0
        %v997 = vadd.f32 %v989, 1.0
        %v998 = vrcp.pop %v990
        %v999 = vmul.f32 1.0, %v998
        %v1000 = vrcp.pop %v991
        %v1001 = vmul.f32 1.0, %v1000
        %v1002 = vrcp.pop %v992
        %v1003 = vmul.f32 1.0, %v1002
        %v1004 = vrcp.pop %v993
        %v1005 = vmul.f32 1.0, %v1004
        %v1006 = vrcp.pop %v994
        %v1007 = vmul.f32 1.0, %v1006
        %v1008 = vrcp.pop %v995
        %v1009 = vmul.f32 1.0, %v1008
        %v1010 = vrcp.pop %v996
        %v1011 = vmul.f32 1.0, %v1010
        %v1012 = vrcp.pop %v997
        %v1013 = vmul.f32 1.0, %v1012
        %1014 = vst [vmem:[%s370] sm:$0xff] %v999
        %1015 = vst [vmem:[%s370 + $0x8] sm:$0xff] %v1001
        %1016 = vst [vmem:[%s370 + $0x10] sm:$0xff] %v1003
        %1017 = vst [vmem:[%s370 + $0x18] sm:$0xff] %v1005
        %1018 = vst [vmem:[%s370 + $0x20] sm:$0xff] %v1007
        %1019 = vst [vmem:[%s370 + $0x28] sm:$0xff] %v1009
        %1020 = vst [vmem:[%s370 + $0x30] sm:$0xff] %v1011
        %1021 = vst [vmem:[%s370 + $0x38] sm:$0xff] %v1013
        %s1022 = sand.u32 %s227, 1
        %s1023 = scalar_lea.sflag [#allocation4], %s1022
        %s1024 = sand.u32 %s227, 1
        %s1025 = smul.addr %s1024, 64
        %s1026 = scalar_lea.vmem [#allocation8], %s1025
        // Predicated region
        $region69: #{tpu_custom_call.1} parent=55 // pred_check
          %p1027 = pneg %p237
        $region70: #{tpu_custom_call.1} parent=55 // pred_check_branch
          %1029 = sbr.rel (%p1027) target = $region72
        $region71: #{tpu_custom_call.1} parent=55 // pred_region
          %s1030 = smul.u32 4, %s25
          %s1032 = ssub.s32 1024, 1024
          %1033 = vsyncadd %s1023, %s1032
          %s1034 = smul.addr %s1030, 2
          %s1035 = smul.addr %s1034, 128
          %s1036 = scalar_lea.hbm %s9, %s1035
          %s1037 = sshll.u32 %s1026, 4
          %s1038 = int_to_ptr.vmem [resolvable:$true] %s1037
          %1043 = dma.vmem_to_hbm [thread:$0]  %s1038, 1024, %s1036, %s1023, 256, 256, 16
        $region72: #{tpu_custom_call.1} parent=55 // pred_fallthru
          _
      $region56: #{tpu_custom_call.1} parent=5 // pred_fallthru
        _
      %p1044 = scmp.le.s32.totalorder 2, %s20
      // Predicated region
      $region73: #{tpu_custom_call.1} parent=5 // pred_check
        %p1045 = pneg %p1044
      $region74: #{tpu_custom_call.1} parent=5 // pred_check_branch
        %1047 = sbr.rel (%p1045) target = $region76
      $region75: #{tpu_custom_call.1} parent=5 // pred_region
        %s1048 = ssub.s32 %s20, 2
        // Predicated region
        $region77: #{tpu_custom_call.1} parent=75 // pred_check
          %p1049 = pneg %p243
        $region78: #{tpu_custom_call.1} parent=75 // pred_check_branch
          %1051 = sbr.rel (%p1049) target = $region80
        $region79: #{tpu_custom_call.1} parent=75 // pred_region
          %s1052 = sand.u32 %s228, 1
          %s1053 = scalar_lea.sflag [#allocation4], %s1052
          %s1054 = sand.u32 %s228, 1
          %s1055 = smul.addr %s1054, 64
          %s1056 = scalar_lea.vmem [#allocation8], %s1055
          %1057 = dma.done %s1053, 1024
        $region80: #{tpu_custom_call.1} parent=75 // pred_fallthru
          _
      $region76: #{tpu_custom_call.1} parent=5 // pred_fallthru
        _
    $region6: #{tpu_custom_call.1} parent=1 // loop_footer
      %s24 = sadd.s32 1, %s20
    $region7: #{tpu_custom_call.1} parent=1 // loop_footer_branch
      %19 = sbr.rel target = $region3
    $region8: #{tpu_custom_call.1} parent=1 // loop_exit
      _
    %1058 = vsyncpa [#allocation3], 1
    %s1059 = scalar_lea.sflag [#allocation3], 1
    %1060 = vsyncpa %s1059, 1
    %1061 = vsyncpa [#allocation6], 1
    %1062 = vsyncpa [#allocation4], 1
    %s1063 = scalar_lea.sflag [#allocation4], 1
    %1064 = vsyncpa %s1063, 1

</llo_original>
